<compile_context>
chip_gen: v5e
topology: v5e:2x2
jax: 0.10.0
libtpu: 0.0.40
codegen_flags: <defaults>
</compile_context>

<pallas_src>
import functools

import jax
import jax.numpy as jnp
from jax.experimental import pallas as pl
from jax.experimental.pallas import tpu as pltpu


def _round_up(n, m):
    return ((n + m - 1) // m) * m


def _critic_kernel(stateT_ref, actionT_ref,
                   w1s_ref, w1a_ref, b1_ref, w2t_ref, b2_ref, w3_ref, b3_ref,
                   q_ref, *, n_sanding, n_patches,
                   inv_max_state, inv_max_action):
    P = n_patches
    ns = n_sanding

    # ---- handcrafted-value path (all (rows, TB); batch on lanes) -------------
    # De-interleave patch x / y rows straight from the state block
    # (rows 2,4,6,... are xs; rows 3,5,7,... are ys) -- no separate DMA stream.
    pxs = stateT_ref[pl.ds(2, P, stride=2), :] * inv_max_state       # (P, TB)
    pys = stateT_ref[pl.ds(3, P, stride=2), :] * inv_max_state       # (P, TB)

    pos_x = stateT_ref[0:1, :] * inv_max_state                       # (1, TB)
    pos_y = stateT_ref[1:2, :] * inv_max_state
    act_x = actionT_ref[0:1, :] * inv_max_action
    act_y = actionT_ref[1:2, :] * inv_max_action

    # Stack pos-distance and action-distance into one (2P, TB) slab so the
    # square/add/sqrt/sqrt chain runs once over full vregs (P=4 -> 8 sublanes).
    dx = jnp.concatenate([pxs - pos_x, pxs - act_x], axis=0)         # (2P, TB)
    dy = jnp.concatenate([pys - pos_y, pys - act_y], axis=0)         # (2P, TB)
    dd = jnp.sqrt(jnp.sqrt(jnp.square(dx) + jnp.square(dy)))         # (2P, TB)
    dist = dd[:P, :]                                                 # (P, TB)
    adist = dd[P:, :]                                                # (P, TB)

    valid = jnp.abs(pxs) <= 1.0        # (P, TB), computed once, reused below

    sand_diff = jnp.where(valid[:ns, :], adist[:ns, :] - dist[:ns, :], 0.0)
    no_sand_diff = jnp.where(
        valid[ns:, :], jnp.sqrt(adist[ns:, :]) - jnp.sqrt(dist[ns:, :]), 0.0)

    improvement = (jnp.mean(no_sand_diff, axis=0, keepdims=True)
                   - jnp.mean(sand_diff, axis=0, keepdims=True))     # (1, TB)
    dist_moved_sq = jnp.square(pos_x - act_x) + jnp.square(pos_y - act_y)
    handcrafted = improvement - dist_moved_sq * 0.5                  # (1, TB)

    # ---- value MLP: Linear(D,32) -> ReLU -> Linear(32,32) -> ReLU -> Linear(32,1)
    # W1 split over [state | action] so the wrapper never builds a (B, D) concat.
    h1 = jnp.maximum(
        jnp.dot(w1s_ref[...], stateT_ref[...], preferred_element_type=jnp.float32)
        + jnp.dot(w1a_ref[...], actionT_ref[...], preferred_element_type=jnp.float32)
        + b1_ref[...], 0.0)                                          # (32, TB)
    h2 = jnp.maximum(
        jnp.dot(w2t_ref[...], h1, preferred_element_type=jnp.float32)
        + b2_ref[...], 0.0)                                          # (32, TB)

    # Final 32->1 layer on VPU + sublane reduce (avoid an N=1 MXU matmul);
    # fold bias and handcrafted bonus into one add; lane-dense (1, TB) store.
    q = jnp.sum(h2 * w3_ref[...], axis=0, keepdims=True)             # (1, TB)
    q_ref[...] = q + (b3_ref[...] + handcrafted)


def critic_improved_forward(state, action, params, *, n_sanding, n_no_sanding,
                            max_state=50.0, max_action=1.0, block_b=4096):
    # Guard: jnp.mean over an empty patch group would produce NaN (same as the
    # PyTorch reference, but ns is baked in statically here).
    assert n_sanding > 0 and n_no_sanding > 0

    state = state.astype(jnp.float32)
    action = action.astype(jnp.float32)
    B, state_dim = state.shape
    action_dim = action.shape[1]
    P = n_sanding + n_no_sanding
    assert state_dim == 2 + 2 * P

    # ---- batch-tile selection -------------------------------------------
    b128 = _round_up(B, 128)                       # lane-dense tiles: mult of 128
    TB = max(128, min((int(block_b) // 128) * 128, b128))
    # v7x megacore: if the batch spans >1 lane tile, keep at least 2 grid steps
    # so the "parallel" axis can be split across both TensorCores.
    if b128 > 128 and _round_up(B, TB) // TB < 2:
        TB = max(128, ((b128 // 2) // 128) * 128)
    Bp = _round_up(B, TB)

    # ---- layout plumbing (transposes only; no concat / gather passes) ----
    stateT = state.T                               # (state_dim, B)
    actionT = action.T                             # (action_dim, B)
    if Bp != B:
        stateT = jnp.pad(stateT, ((0, 0), (0, Bp - B)))
        actionT = jnp.pad(actionT, ((0, 0), (0, Bp - B)))

    w1, b1, w2, b2, w3, b3 = params
    w1s = jnp.asarray(w1[:state_dim].T, jnp.float32)      # (32, state_dim)
    w1a = jnp.asarray(w1[state_dim:].T, jnp.float32)      # (32, action_dim)
    w2t = jnp.asarray(w2.T, jnp.float32)                  # (32, 32)
    w3c = jnp.asarray(w3.reshape(-1, 1), jnp.float32)     # (32, 1)
    b1c = jnp.asarray(b1.reshape(-1, 1), jnp.float32)     # (32, 1)
    b2c = jnp.asarray(b2.reshape(-1, 1), jnp.float32)     # (32, 1)
    b3c = jnp.asarray(b3.reshape(1, 1), jnp.float32)      # (1, 1)

    kernel = functools.partial(
        _critic_kernel,
        n_sanding=n_sanding,
        n_patches=P,
        inv_max_state=1.0 / float(max_state),
        inv_max_action=1.0 / float(max_action),
    )

    batched = lambda i: (0, i)     # tile the lane (batch) axis
    const = lambda i: (0, 0)       # weights resident in VMEM across grid steps

    q_row = pl.pallas_call(
        kernel,
        out_shape=jax.ShapeDtypeStruct((1, Bp), jnp.float32),
        grid=(Bp // TB,),
        in_specs=[
            pl.BlockSpec((state_dim, TB), batched),
            pl.BlockSpec((action_dim, TB), batched),
            pl.BlockSpec(w1s.shape, const),
            pl.BlockSpec(w1a.shape, const),
            pl.BlockSpec(b1c.shape, const),
            pl.BlockSpec(w2t.shape, const),
            pl.BlockSpec(b2c.shape, const),
            pl.BlockSpec(w3c.shape, const),
            pl.BlockSpec(b3c.shape, const),
        ],
        out_specs=pl.BlockSpec((1, TB), batched),
        compiler_params=pltpu.CompilerParams(
            dimension_semantics=("parallel",)),
    )(stateT, actionT, w1s, w1a, b1c, w2t, b2c, w3c, b3c)

    # lane-dense (1, Bp) -> (B, 1)
    return q_row.reshape(Bp, 1)[:B]


def _init_params(key, in_dim, hidden=32):
    # PyTorch-style uniform(-1/sqrt(fan_in), 1/sqrt(fan_in)) init,
    # stored as (in, out) for right-multiplication in the reference.
    ks = jax.random.split(key, 6)

    def lin(kw, kb, fi, fo):
        bound = 1.0 / jnp.sqrt(float(fi))
        w = jax.random.uniform(kw, (fi, fo), jnp.float32, -bound, bound)
        b = jax.random.uniform(kb, (fo,), jnp.float32, -bound, bound)
        return w, b

    w1, b1 = lin(ks[0], ks[1], in_dim, hidden)
    w2, b2 = lin(ks[2], ks[3], hidden, hidden)
    w3, b3 = lin(ks[4], ks[5], hidden, 1)
    return (w1, b1, w2, b2, w3, b3)


def _reference_forward(state, action, params, *, n_sanding, n_no_sanding,
                       max_state=50.0, max_action=1.0):
    # pure-JAX mirror of the PyTorch forward, for correctness checking
    w1, b1, w2, b2, w3, b3 = params
    x = jnp.concatenate([state, action], axis=1)
    state_n = state / max_state
    action_n = action / max_action
    pos = state_n[:, :2]
    patches = state_n[:, 2:]
    pxs = patches[:, 0::2]
    pys = patches[:, 1::2]
    dist = jnp.sqrt(jnp.sqrt(jnp.square(pxs - pos[:, 0:1]) + jnp.square(pys - pos[:, 1:2])))
    adist = jnp.sqrt(jnp.sqrt(jnp.square(pxs - action_n[:, 0:1])
                              + jnp.square(pys - action_n[:, 1:2])))
    ns = n_sanding
    sand = jnp.where(jnp.abs(pxs[:, :ns]) <= 1.0, adist[:, :ns] - dist[:, :ns], 0.0)
    nosand = jnp.where(jnp.abs(pxs[:, ns:]) <= 1.0,
                       jnp.sqrt(adist[:, ns:]) - jnp.sqrt(dist[:, ns:]), 0.0)
    improvement = jnp.mean(nosand, axis=1) - jnp.mean(sand, axis=1)
    dist_moved_sq = jnp.sum(jnp.square(pos - action_n), axis=1)
    handcrafted = improvement - dist_moved_sq / 2.0
    h1 = jnp.maximum(x @ w1 + b1, 0.0)
    h2 = jnp.maximum(h1 @ w2 + b2, 0.0)
    return (h2 @ w3 + b3) + handcrafted[:, None]


if __name__ == "__main__":
    n_sanding, n_no_sanding = 2, 2
    state_dim = 2 + 2 * (n_sanding + n_no_sanding)   # 10
    action_dim = 2
    batch = 8
    max_state, max_action = 50.0, 1.0

    key = jax.random.PRNGKey(0)
    k_state, k_action, k_params = jax.random.split(key, 3)
    state = jax.random.uniform(k_state, (batch, state_dim), jnp.float32, -50.0, 50.0)
    action = jax.random.uniform(k_action, (batch, action_dim), jnp.float32, -1.0, 1.0)
    params = _init_params(k_params, state_dim + action_dim)

    q = critic_improved_forward(
        state, action, params,
        n_sanding=n_sanding, n_no_sanding=n_no_sanding,
        max_state=max_state, max_action=max_action)
    q = jax.block_until_ready(q)

    q_ref = _reference_forward(
        state, action, params,
        n_sanding=n_sanding, n_no_sanding=n_no_sanding,
        max_state=max_state, max_action=max_action)
    assert q.shape == (batch, 1)
    assert jnp.allclose(q, q_ref, atol=1e-4, rtol=1e-4)
    print("KERNEL_OK")
</pallas_src>

<mosaic_0001>
module attributes {stable_mosaic.version = 11 : i64} {
  func.func @_critic_kernel(%arg0: i32, %arg1: memref<10x128xf32, #tpu.memory_space<vmem>>, %arg2: memref<2x128xf32, #tpu.memory_space<vmem>>, %arg3: memref<32x10xf32, #tpu.memory_space<vmem>>, %arg4: memref<32x2xf32, #tpu.memory_space<vmem>>, %arg5: memref<32x1xf32, #tpu.memory_space<vmem>>, %arg6: memref<32x32xf32, #tpu.memory_space<vmem>>, %arg7: memref<32x1xf32, #tpu.memory_space<vmem>>, %arg8: memref<32x1xf32, #tpu.memory_space<vmem>>, %arg9: memref<1x1xf32, #tpu.memory_space<vmem>>, %arg10: memref<1x128xf32, #tpu.memory_space<vmem>>) attributes {dimension_semantics = [#tpu.dimension_semantics<parallel>], iteration_bounds = array<i64: 1>, scalar_prefetch = 0 : i64, scratch_operands = 0 : i64, tpu.core_type = #tpu.core_type<tc>, window_params = [{transform_indices = @transform_0, window_bounds = array<i64: 10, 128>}, {transform_indices = @transform_1, window_bounds = array<i64: 2, 128>}, {pipeline_mode = #tpu.pipeline_mode<synchronous>, transform_indices = @transform_2, window_bounds = array<i64: 32, 10>}, {pipeline_mode = #tpu.pipeline_mode<synchronous>, transform_indices = @transform_3, window_bounds = array<i64: 32, 2>}, {pipeline_mode = #tpu.pipeline_mode<synchronous>, transform_indices = @transform_4, window_bounds = array<i64: 32, 1>}, {pipeline_mode = #tpu.pipeline_mode<synchronous>, transform_indices = @transform_5, window_bounds = array<i64: 32, 32>}, {pipeline_mode = #tpu.pipeline_mode<synchronous>, transform_indices = @transform_6, window_bounds = array<i64: 32, 1>}, {pipeline_mode = #tpu.pipeline_mode<synchronous>, transform_indices = @transform_7, window_bounds = array<i64: 32, 1>}, {pipeline_mode = #tpu.pipeline_mode<synchronous>, transform_indices = @transform_8, window_bounds = array<i64: 1, 1>}, {transform_indices = @transform_9, window_bounds = array<i64: 1, 128>}]} {
    %c2 = arith.constant 2 : index
    %c0 = arith.constant 0 : index
    %0 = tpu.strided_load %arg1[%c2, %c0] {strides = array<i32: 2, 1>} : memref<10x128xf32, #tpu.memory_space<vmem>>, vector<4x128xf32>
    %cst = arith.constant 2.000000e-02 : f32
    %1 = vector.broadcast %cst : f32 to vector<4x128xf32>
    %2 = arith.mulf %0, %1 : vector<4x128xf32>
    %c3 = arith.constant 3 : index
    %c0_0 = arith.constant 0 : index
    %3 = tpu.strided_load %arg1[%c3, %c0_0] {strides = array<i32: 2, 1>} : memref<10x128xf32, #tpu.memory_space<vmem>>, vector<4x128xf32>
    %cst_1 = arith.constant 2.000000e-02 : f32
    %4 = vector.broadcast %cst_1 : f32 to vector<4x128xf32>
    %5 = arith.mulf %3, %4 : vector<4x128xf32>
    %c0_2 = arith.constant 0 : index
    %c0_3 = arith.constant 0 : index
    %6 = vector.load %arg1[%c0_2, %c0_3] : memref<10x128xf32, #tpu.memory_space<vmem>>, vector<1x128xf32>
    %cst_4 = arith.constant 2.000000e-02 : f32
    %7 = vector.broadcast %cst_4 : f32 to vector<1x128xf32>
    %8 = arith.mulf %6, %7 : vector<1x128xf32>
    %c1 = arith.constant 1 : index
    %c0_5 = arith.constant 0 : index
    %9 = vector.load %arg1[%c1, %c0_5] : memref<10x128xf32, #tpu.memory_space<vmem>>, vector<1x128xf32>
    %cst_6 = arith.constant 2.000000e-02 : f32
    %10 = vector.broadcast %cst_6 : f32 to vector<1x128xf32>
    %11 = arith.mulf %9, %10 : vector<1x128xf32>
    %c0_7 = arith.constant 0 : index
    %c0_8 = arith.constant 0 : index
    %12 = vector.load %arg2[%c0_7, %c0_8] : memref<2x128xf32, #tpu.memory_space<vmem>>, vector<1x128xf32>
    %cst_9 = arith.constant 1.000000e+00 : f32
    %13 = vector.broadcast %cst_9 : f32 to vector<1x128xf32>
    %14 = arith.mulf %12, %13 : vector<1x128xf32>
    %c1_10 = arith.constant 1 : index
    %c0_11 = arith.constant 0 : index
    %15 = vector.load %arg2[%c1_10, %c0_11] : memref<2x128xf32, #tpu.memory_space<vmem>>, vector<1x128xf32>
    %cst_12 = arith.constant 1.000000e+00 : f32
    %16 = vector.broadcast %cst_12 : f32 to vector<1x128xf32>
    %17 = arith.mulf %15, %16 : vector<1x128xf32>
    %18 = vector.broadcast %8 : vector<1x128xf32> to vector<4x128xf32>
    %19 = arith.subf %2, %18 : vector<4x128xf32>
    %20 = vector.broadcast %14 : vector<1x128xf32> to vector<4x128xf32>
    %21 = arith.subf %2, %20 : vector<4x128xf32>
    %22 = tpu.concatenate %19, %21 in 0 : vector<4x128xf32>, vector<4x128xf32> -> vector<8x128xf32>
    %23 = vector.broadcast %11 : vector<1x128xf32> to vector<4x128xf32>
    %24 = arith.subf %5, %23 : vector<4x128xf32>
    %25 = vector.broadcast %17 : vector<1x128xf32> to vector<4x128xf32>
    %26 = arith.subf %5, %25 : vector<4x128xf32>
    %27 = tpu.concatenate %24, %26 in 0 : vector<4x128xf32>, vector<4x128xf32> -> vector<8x128xf32>
    %28 = arith.mulf %22, %22 : vector<8x128xf32>
    %29 = arith.mulf %27, %27 : vector<8x128xf32>
    %30 = arith.addf %28, %29 : vector<8x128xf32>
    %31 = math.sqrt %30 : vector<8x128xf32>
    %32 = math.sqrt %31 : vector<8x128xf32>
    %33 = vector.extract_strided_slice %32 {offsets = [0, 0], sizes = [4, 128], strides = [1, 1]} : vector<8x128xf32> to vector<4x128xf32>
    %34 = vector.extract_strided_slice %32 {offsets = [4, 0], sizes = [4, 128], strides = [1, 1]} : vector<8x128xf32> to vector<4x128xf32>
    %35 = math.absf %2 : vector<4x128xf32>
    %cst_13 = arith.constant 1.000000e+00 : f32
    %36 = vector.broadcast %cst_13 : f32 to vector<4x128xf32>
    %37 = arith.cmpf ole, %35, %36 : vector<4x128xf32>
    %38 = vector.extract_strided_slice %37 {offsets = [0, 0], sizes = [2, 128], strides = [1, 1]} : vector<4x128xi1> to vector<2x128xi1>
    %39 = vector.extract_strided_slice %34 {offsets = [0, 0], sizes = [2, 128], strides = [1, 1]} : vector<4x128xf32> to vector<2x128xf32>
    %40 = vector.extract_strided_slice %33 {offsets = [0, 0], sizes = [2, 128], strides = [1, 1]} : vector<4x128xf32> to vector<2x128xf32>
    %41 = arith.subf %39, %40 : vector<2x128xf32>
    %cst_14 = arith.constant 0.000000e+00 : f32
    %42 = vector.broadcast %cst_14 : f32 to vector<2x128xf32>
    %43 = arith.select %38, %41, %42 : vector<2x128xi1>, vector<2x128xf32>
    %44 = vector.extract_strided_slice %37 {offsets = [2, 0], sizes = [2, 128], strides = [1, 1]} : vector<4x128xi1> to vector<2x128xi1>
    %45 = vector.extract_strided_slice %34 {offsets = [2, 0], sizes = [2, 128], strides = [1, 1]} : vector<4x128xf32> to vector<2x128xf32>
    %46 = math.sqrt %45 : vector<2x128xf32>
    %47 = vector.extract_strided_slice %33 {offsets = [2, 0], sizes = [2, 128], strides = [1, 1]} : vector<4x128xf32> to vector<2x128xf32>
    %48 = math.sqrt %47 : vector<2x128xf32>
    %49 = arith.subf %46, %48 : vector<2x128xf32>
    %cst_15 = arith.constant 0.000000e+00 : f32
    %50 = vector.broadcast %cst_15 : f32 to vector<2x128xf32>
    %51 = arith.select %44, %49, %50 : vector<2x128xi1>, vector<2x128xf32>
    %cst_16 = arith.constant dense<0.000000e+00> : vector<128xf32>
    %52 = vector.multi_reduction <add>, %51, %cst_16 [0] : vector<2x128xf32> to vector<128xf32>
    %53 = vector.shape_cast %52 : vector<128xf32> to vector<1x128xf32>
    %cst_17 = arith.constant 2.000000e+00 : f32
    %54 = vector.broadcast %cst_17 : f32 to vector<1x128xf32>
    %55 = arith.divf %53, %54 : vector<1x128xf32>
    %cst_18 = arith.constant dense<0.000000e+00> : vector<128xf32>
    %56 = vector.multi_reduction <add>, %43, %cst_18 [0] : vector<2x128xf32> to vector<128xf32>
    %57 = vector.shape_cast %56 : vector<128xf32> to vector<1x128xf32>
    %cst_19 = arith.constant 2.000000e+00 : f32
    %58 = vector.broadcast %cst_19 : f32 to vector<1x128xf32>
    %59 = arith.divf %57, %58 : vector<1x128xf32>
    %60 = arith.subf %55, %59 : vector<1x128xf32>
    %61 = arith.subf %8, %14 : vector<1x128xf32>
    %62 = arith.mulf %61, %61 : vector<1x128xf32>
    %63 = arith.subf %11, %17 : vector<1x128xf32>
    %64 = arith.mulf %63, %63 : vector<1x128xf32>
    %65 = arith.addf %62, %64 : vector<1x128xf32>
    %cst_20 = arith.constant 5.000000e-01 : f32
    %66 = vector.broadcast %cst_20 : f32 to vector<1x128xf32>
    %67 = arith.mulf %65, %66 : vector<1x128xf32>
    %68 = arith.subf %60, %67 : vector<1x128xf32>
    %c0_21 = arith.constant 0 : index
    %c0_22 = arith.constant 0 : index
    %69 = vector.load %arg3[%c0_21, %c0_22] : memref<32x10xf32, #tpu.memory_space<vmem>>, vector<32x10xf32>
    %c0_23 = arith.constant 0 : index
    %c0_24 = arith.constant 0 : index
    %70 = vector.load %arg1[%c0_23, %c0_24] : memref<10x128xf32, #tpu.memory_space<vmem>>, vector<10x128xf32>
    %cst_25 = arith.constant dense<0.000000e+00> : vector<32x128xf32>
    %71 = tpu.matmul %69, %70, %cst_25 {dimension_numbers = #tpu.dot_dimension_numbers<[1], [0], [0], [1], [0, 0, 1, 1], [], []>} : vector<32x10xf32>, vector<10x128xf32>, vector<32x128xf32> -> vector<32x128xf32>
    %c0_26 = arith.constant 0 : index
    %c0_27 = arith.constant 0 : index
    %72 = vector.load %arg4[%c0_26, %c0_27] : memref<32x2xf32, #tpu.memory_space<vmem>>, vector<32x2xf32>
    %c0_28 = arith.constant 0 : index
    %c0_29 = arith.constant 0 : index
    %73 = vector.load %arg2[%c0_28, %c0_29] : memref<2x128xf32, #tpu.memory_space<vmem>>, vector<2x128xf32>
    %cst_30 = arith.constant dense<0.000000e+00> : vector<32x128xf32>
    %74 = tpu.matmul %72, %73, %cst_30 {dimension_numbers = #tpu.dot_dimension_numbers<[1], [0], [0], [1], [0, 0, 1, 1], [], []>} : vector<32x2xf32>, vector<2x128xf32>, vector<32x128xf32> -> vector<32x128xf32>
    %75 = arith.addf %71, %74 : vector<32x128xf32>
    %c0_31 = arith.constant 0 : index
    %c0_32 = arith.constant 0 : index
    %76 = vector.load %arg5[%c0_31, %c0_32] : memref<32x1xf32, #tpu.memory_space<vmem>>, vector<32x1xf32>
    %77 = vector.broadcast %76 : vector<32x1xf32> to vector<32x128xf32>
    %78 = arith.addf %75, %77 : vector<32x128xf32>
    %cst_33 = arith.constant 0.000000e+00 : f32
    %79 = vector.broadcast %cst_33 : f32 to vector<32x128xf32>
    %80 = arith.maximumf %78, %79 : vector<32x128xf32>
    %c0_34 = arith.constant 0 : index
    %c0_35 = arith.constant 0 : index
    %81 = vector.load %arg6[%c0_34, %c0_35] : memref<32x32xf32, #tpu.memory_space<vmem>>, vector<32x32xf32>
    %cst_36 = arith.constant dense<0.000000e+00> : vector<32x128xf32>
    %82 = tpu.matmul %81, %80, %cst_36 {dimension_numbers = #tpu.dot_dimension_numbers<[1], [0], [0], [1], [0, 0, 1, 1], [], []>} : vector<32x32xf32>, vector<32x128xf32>, vector<32x128xf32> -> vector<32x128xf32>
    %c0_37 = arith.constant 0 : index
    %c0_38 = arith.constant 0 : index
    %83 = vector.load %arg7[%c0_37, %c0_38] : memref<32x1xf32, #tpu.memory_space<vmem>>, vector<32x1xf32>
    %84 = vector.broadcast %83 : vector<32x1xf32> to vector<32x128xf32>
    %85 = arith.addf %82, %84 : vector<32x128xf32>
    %cst_39 = arith.constant 0.000000e+00 : f32
    %86 = vector.broadcast %cst_39 : f32 to vector<32x128xf32>
    %87 = arith.maximumf %85, %86 : vector<32x128xf32>
    %c0_40 = arith.constant 0 : index
    %c0_41 = arith.constant 0 : index
    %88 = vector.load %arg8[%c0_40, %c0_41] : memref<32x1xf32, #tpu.memory_space<vmem>>, vector<32x1xf32>
    %89 = vector.broadcast %88 : vector<32x1xf32> to vector<32x128xf32>
    %90 = arith.mulf %87, %89 : vector<32x128xf32>
    %cst_42 = arith.constant dense<0.000000e+00> : vector<128xf32>
    %91 = vector.multi_reduction <add>, %90, %cst_42 [0] : vector<32x128xf32> to vector<128xf32>
    %92 = vector.shape_cast %91 : vector<128xf32> to vector<1x128xf32>
    %c0_43 = arith.constant 0 : index
    %c0_44 = arith.constant 0 : index
    %93 = vector.load %arg9[%c0_43, %c0_44] : memref<1x1xf32, #tpu.memory_space<vmem>>, vector<1x1xf32>
    %94 = vector.broadcast %93 : vector<1x1xf32> to vector<1x128xf32>
    %95 = arith.addf %94, %68 : vector<1x128xf32>
    %96 = arith.addf %92, %95 : vector<1x128xf32>
    %c0_45 = arith.constant 0 : index
    %c0_46 = arith.constant 0 : index
    %97 = vector.load %arg10[%c0_45, %c0_46] : memref<1x128xf32, #tpu.memory_space<vmem>>, vector<1x128xf32>
    tpu.vector_store %arg10[%c0_45, %c0_46], %96 {strides = array<i32>} : memref<1x128xf32, #tpu.memory_space<vmem>>, vector<1x128xf32>,
    return
  }
  func.func @transform_0(%arg0: i32) -> (i32, i32) {
    %c0_i32 = arith.constant 0 : i32
    %c0_i32_0 = arith.constant 0 : i32
    return %c0_i32, %arg0 : i32, i32
  }
  func.func @transform_1(%arg0: i32) -> (i32, i32) {
    %c0_i32 = arith.constant 0 : i32
    %c0_i32_0 = arith.constant 0 : i32
    return %c0_i32, %arg0 : i32, i32
  }
  func.func @transform_2(%arg0: i32) -> (i32, i32) {
    %c0_i32 = arith.constant 0 : i32
    %c0_i32_0 = arith.constant 0 : i32
    %c0_i32_1 = arith.constant 0 : i32
    return %c0_i32, %c0_i32_0 : i32, i32
  }
  func.func @transform_3(%arg0: i32) -> (i32, i32) {
    %c0_i32 = arith.constant 0 : i32
    %c0_i32_0 = arith.constant 0 : i32
    %c0_i32_1 = arith.constant 0 : i32
    return %c0_i32, %c0_i32_0 : i32, i32
  }
  func.func @transform_4(%arg0: i32) -> (i32, i32) {
    %c0_i32 = arith.constant 0 : i32
    %c0_i32_0 = arith.constant 0 : i32
    %c0_i32_1 = arith.constant 0 : i32
    return %c0_i32, %c0_i32_0 : i32, i32
  }
  func.func @transform_5(%arg0: i32) -> (i32, i32) {
    %c0_i32 = arith.constant 0 : i32
    %c0_i32_0 = arith.constant 0 : i32
    %c0_i32_1 = arith.constant 0 : i32
    return %c0_i32, %c0_i32_0 : i32, i32
  }
  func.func @transform_6(%arg0: i32) -> (i32, i32) {
    %c0_i32 = arith.constant 0 : i32
    %c0_i32_0 = arith.constant 0 : i32
    %c0_i32_1 = arith.constant 0 : i32
    return %c0_i32, %c0_i32_0 : i32, i32
  }
  func.func @transform_7(%arg0: i32) -> (i32, i32) {
    %c0_i32 = arith.constant 0 : i32
    %c0_i32_0 = arith.constant 0 : i32
    %c0_i32_1 = arith.constant 0 : i32
    return %c0_i32, %c0_i32_0 : i32, i32
  }
  func.func @transform_8(%arg0: i32) -> (i32, i32) {
    %c0_i32 = arith.constant 0 : i32
    %c0_i32_0 = arith.constant 0 : i32
    %c0_i32_1 = arith.constant 0 : i32
    return %c0_i32, %c0_i32_0 : i32, i32
  }
  func.func @transform_9(%arg0: i32) -> (i32, i32) {
    %c0_i32 = arith.constant 0 : i32
    %c0_i32_0 = arith.constant 0 : i32
    return %c0_i32, %arg0 : i32, i32
  }
}

</mosaic_0001>

<llo_original>
// kernel: tpu_custom_call.1
$region0: #{tpu_custom_call.1}
  #allocation0 [shape = 'u32[]', space=smem, size = 0x4, offset = 0x4, fixed_abs, tag = 'smem constant byte address 0x4 - core index']
  #allocation1 [shape = 'u32[72,128]{1,0:T(1,128)}', space=vmem, size = 0x9000, scoped, tag = 'internal scratch']
  #allocation2 [shape = 'f32[1,1]{1,0:T(1,128)S(1)}', space=vmem, size = 0x200, scoped, tag = 'scoped memory for tpu_custom_call.1']
  %s0 = inlined_call_operand.vmem [shape: f32[10,128], index: 0, kind: input, shape index: {}]
  %s1 = inlined_call_operand.vmem [shape: f32[2,128], index: 1, kind: input, shape index: {}]
  %s2 = inlined_call_operand.vmem [shape: f32[32,10], index: 2, kind: input, shape index: {}]
  %s3 = inlined_call_operand.vmem [shape: f32[32,2], index: 3, kind: input, shape index: {}]
  %s4 = inlined_call_operand.vmem [shape: f32[32,1], index: 4, kind: input, shape index: {}]
  %s5 = inlined_call_operand.vmem [shape: f32[32,32], index: 5, kind: input, shape index: {}]
  %s6 = inlined_call_operand.vmem [shape: f32[32,1], index: 6, kind: input, shape index: {}]
  %s7 = inlined_call_operand.vmem [shape: f32[32,1], index: 7, kind: input, shape index: {}]
  %s8 = inlined_call_operand.<no memory space> [shape: f32[1,1], index: 8, kind: input, shape index: {}]
  %s9 = inlined_call_operand.hbm [shape: f32[1,128], index: 9, kind: output, shape index: {}]
  %s10 = sld [smem:[#allocation0]]
  $region46: #{tpu_custom_call.1} parent=0
    _
  %s12 = ssub.s32 1, %s10
  %s13 = scalar_select 0, %s12, %s10
  %v14 = vstv %s8
  %15 = vst [vmem:[#allocation2] sm:$0x1] %v14
  $region1: #{tpu_custom_call.1} parent=0
    #allocation3 [shape = 'u8[512]{0}', space=vmem, size = 0x400, scoped, tag = 'output window, operand 0, single buffered']
    #allocation4 [shape = 's32[1]{0}', space=sflag, size = 0x4, scoped, tag = 'scoped memory for tpu_custom_call.1']
    %16 = vsyncpa [#allocation4], 0
    // Predicated region
    $region2: #{tpu_custom_call.1} parent=1 // pred_check
      _
    $region3: #{tpu_custom_call.1} parent=1 // pred_check_branch
      %18 = sbr.rel (0) target = $region5
    $region4: #{tpu_custom_call.1} parent=1 // pred_region
      _
    $region5: #{tpu_custom_call.1} parent=1 // pred_fallthru
      _
    // Predicated region
    $region6: #{tpu_custom_call.1} parent=1 // pred_check
      _
    $region7: #{tpu_custom_call.1} parent=1 // pred_check_branch
      %20 = sbr.rel (0) target = $region9
    $region8: #{tpu_custom_call.1} parent=1 // pred_region
      _
    $region9: #{tpu_custom_call.1} parent=1 // pred_fallthru
      _
    // Predicated region
    $region10: #{tpu_custom_call.1} parent=1 // pred_check
      _
    $region11: #{tpu_custom_call.1} parent=1 // pred_check_branch
      %22 = sbr.rel (0) target = $region13
    $region12: #{tpu_custom_call.1} parent=1 // pred_region
      _
    $region13: #{tpu_custom_call.1} parent=1 // pred_fallthru
      _
    // Predicated region
    $region14: #{tpu_custom_call.1} parent=1 // pred_check
      _
    $region15: #{tpu_custom_call.1} parent=1 // pred_check_branch
      %24 = sbr.rel (0) target = $region17
    $region16: #{tpu_custom_call.1} parent=1 // pred_region
      _
    $region17: #{tpu_custom_call.1} parent=1 // pred_fallthru
      _
    // Predicated region
    $region18: #{tpu_custom_call.1} parent=1 // pred_check
      _
    $region19: #{tpu_custom_call.1} parent=1 // pred_check_branch
      %26 = sbr.rel (0) target = $region21
    $region20: #{tpu_custom_call.1} parent=1 // pred_region
      _
    $region21: #{tpu_custom_call.1} parent=1 // pred_fallthru
      _
    // Predicated region
    $region22: #{tpu_custom_call.1} parent=1 // pred_check
      _
    $region23: #{tpu_custom_call.1} parent=1 // pred_check_branch
      %28 = sbr.rel (0) target = $region25
    $region24: #{tpu_custom_call.1} parent=1 // pred_region
      _
    $region25: #{tpu_custom_call.1} parent=1 // pred_fallthru
      _
    // Predicated region
    $region26: #{tpu_custom_call.1} parent=1 // pred_check
      _
    $region27: #{tpu_custom_call.1} parent=1 // pred_check_branch
      %30 = sbr.rel (0) target = $region29
    $region28: #{tpu_custom_call.1} parent=1 // pred_region
      _
    $region29: #{tpu_custom_call.1} parent=1 // pred_fallthru
      _
    // Predicated region
    $region30: #{tpu_custom_call.1} parent=1 // pred_check
      _
    $region31: #{tpu_custom_call.1} parent=1 // pred_check_branch
      %32 = sbr.rel (0) target = $region33
    $region32: #{tpu_custom_call.1} parent=1 // pred_region
      _
    $region33: #{tpu_custom_call.1} parent=1 // pred_fallthru
      _
    // Predicated region
    $region34: #{tpu_custom_call.1} parent=1 // pred_check
      _
    $region35: #{tpu_custom_call.1} parent=1 // pred_check_branch
      %34 = sbr.rel (0) target = $region37
    $region36: #{tpu_custom_call.1} parent=1 // pred_region
      _
    $region37: #{tpu_custom_call.1} parent=1 // pred_fallthru
      _
    %s35 = scalar_lea.vmem %s0, 2
    %v36 = vld [vmem:[%s35] ss:$2 sm:$0xf]
    %v37 = vmul.f32 %v36, 0.02
    %s38 = scalar_lea.vmem %s0, 3
    %v39 = vld [vmem:[%s38] ss:$2 sm:$0xf]
    %v40 = vmul.f32 %v39, 0.02
    %v41 = vld [vmem:[%s0] sm:$0x1]
    %v42 = vmul.f32 %v41, 0.02
    %v43 = vld [vmem:[%s0 + $0x1] sm:$0x1]
    %v44 = vmul.f32 %v43, 0.02
    %v45 = vld [vmem:[%s1] sm:$0x1]
    %v46 = vld [vmem:[%s1 + $0x1] sm:$0x1]
    %v47 = vperm.slane %v42, 0
    %v48 = vsub.f32 %v37, %v47
    %v49 = vperm.slane %v45, 0
    %v50 = vsub.f32 %v37, %v49
    %v52 = vrot.slane %v50, 4
    %vm54 = vcmask 1043456
    %v55 = vsel %vm54, %v48, %v52
    %v56 = vperm.slane %v44, 0
    %v57 = vsub.f32 %v40, %v56
    %v58 = vperm.slane %v46, 0
    %v59 = vsub.f32 %v40, %v58
    %v61 = vrot.slane %v59, 4
    %v63 = vsel %vm54, %v57, %v61
    %v64 = vmul.f32 %v55, %v55
    %v65 = vmul.f32 %v63, %v63
    %v66 = vadd.f32 %v64, %v65
    %v67 = vrsqrt.pop %v66
    %v68 = vmul.f32 %v67, %v66
    %v69 = vmul.f32 %v68, %v67
    %v70 = vmul.f32 0.5, %v69
    %v71 = vsub.f32 1.5, %v70
    %v72 = vmul.f32 %v67, %v71
    %v73 = vmul.f32 %v66, %v72
    %vm74 = vcmp.eq.f32.partialorder %v66, inf
    %v75 = vsel %vm74, %v66, %v73
    %vm76 = vcmp.eq.f32.partialorder %v66, 0.0
    %v77 = vand.u32 %v66, 2147483648
    %v78 = vsel %vm76, %v77, %v75
    %v79 = vrsqrt.pop %v78
    %v80 = vmul.f32 %v79, %v78
    %v81 = vmul.f32 %v80, %v79
    %v82 = vmul.f32 0.5, %v81
    %v83 = vsub.f32 1.5, %v82
    %v84 = vmul.f32 %v79, %v83
    %v85 = vmul.f32 %v78, %v84
    %vm86 = vcmp.eq.f32.partialorder %v78, inf
    %v87 = vsel %vm86, %v78, %v85
    %vm88 = vcmp.eq.f32.partialorder %v78, 0.0
    %v89 = vand.u32 %v78, 2147483648
    %v90 = vsel %vm88, %v89, %v87
    %v91 = vand.u32 2147483647, %v37
    %vm92 = vcmp.le.f32.partialorder %v91, 1.0
    %v94 = vrot.slane %v90, 4
    %v96 = vsub.f32 %v90, %v94
    %v98 = vrot.slane %v96, 4
    %v100 = vsel %vm92, %v98, 0.0
    %v101 = vrsqrt.pop %v90
    %v102 = vmul.f32 %v101, %v90
    %v103 = vmul.f32 %v102, %v101
    %v104 = vmul.f32 0.5, %v103
    %v105 = vsub.f32 1.5, %v104
    %v106 = vmul.f32 %v101, %v105
    %v107 = vmul.f32 %v90, %v106
    %vm108 = vcmp.eq.f32.partialorder %v90, inf
    %v109 = vsel %vm108, %v90, %v107
    %vm110 = vcmp.eq.f32.partialorder %v90, 0.0
    %v111 = vand.u32 %v90, 2147483648
    %v112 = vsel %vm110, %v111, %v109
    %v114 = vrot.slane %v112, 4
    %v116 = vsub.f32 %v112, %v114
    %v118 = vrot.slane %v116, 4
    %v120 = vsel %vm92, %v118, 0.0
    %v122 = vrot.slane %v120, 2
    %vm124 = vcmask 1041408
    %v125 = vsel %vm124, %v122, 0.0
    %v126 = vrot.slane %v125, 4
    %v127 = vadd.f32 %v125, %v126
    %v128 = vrot.slane %v127, 2
    %v129 = vadd.f32 %v127, %v128
    %v130 = vrot.slane %v129, 1
    %v131 = vadd.f32 %v129, %v130
    %v132 = vrcp.pop 2.0
    %v133 = vmul.f32 2.0, %v132
    %v134 = vsub.f32 1.0, %v133
    %v135 = vmul.f32 %v132, %v134
    %v136 = vadd.f32 %v132, %v135
    %vm137 = vweird.f32 %v132
    %v138 = vsel %vm137, %v132, %v136
    %v139 = vmul.f32 %v131, %v138
    %v140 = vsel %vm124, %v100, 0.0
    %v141 = vrot.slane %v140, 4
    %v142 = vadd.f32 %v140, %v141
    %v143 = vrot.slane %v142, 2
    %v144 = vadd.f32 %v142, %v143
    %v145 = vrot.slane %v144, 1
    %v146 = vadd.f32 %v144, %v145
    %v147 = vmul.f32 %v146, %v138
    %v148 = vsub.f32 %v139, %v147
    %v149 = vsub.f32 %v42, %v45
    %v150 = vmul.f32 %v149, %v149
    %v151 = vsub.f32 %v44, %v46
    %v152 = vmul.f32 %v151, %v151
    %v153 = vadd.f32 %v150, %v152
    %v154 = vmul.f32 %v153, 0.5
    %v155 = vsub.f32 %v148, %v154
    %v156 = vld [vmem:[%s2] sm:$0xff]
    %v157 = vld [vmem:[%s2 + $0x8] sm:$0xff]
    %v158 = vld [vmem:[%s2 + $0x10] sm:$0xff]
    %v159 = vld [vmem:[%s2 + $0x18] sm:$0xff]
    %v160 = vld [vmem:[%s0] sm:$0xff]
    %v161 = vld [vmem:[%s0 + $0x8] sm:$0x3]
    %v162 = vld [vmem:[%s3] sm:$0xff]
    %v163 = vld [vmem:[%s3 + $0x8] sm:$0xff]
    %v164 = vld [vmem:[%s3 + $0x10] sm:$0xff]
    %v165 = vld [vmem:[%s3 + $0x18] sm:$0xff]
    %v166 = vld [vmem:[%s1] sm:$0x3]
    %vm167 = vcmask 15360
    %v169 = vsel %vm167, %v162, 0
    %v172 = vsel %vm167, %v163, 0
    %v175 = vsel %vm167, %v164, 0
    %v178 = vsel %vm167, %v165, 0
    %v181 = vsel %vm124, %v166, 0
    %183 = vmatpush.msra.mxu0 0.0
    %184 = vmatpush.msra.mxu0 0.0
    %185 = vmatpush.msra.mxu0 0.0
    %186 = vmatpush.msra.mxu0 0.0
    %187 = vmatpush.msra.mxu0 0.0
    %188 = vmatpush.msra.mxu0 0.0
    %189 = vmatpush.msra.mxu0 0.0
    %190 = vmatpush.msra.mxu0 0.0
    %191 = vmatpush.msra.mxu0 0.0
    %192 = vmatpush.msra.mxu0 0.0
    %193 = vmatpush.msra.mxu0 0.0
    %194 = vmatpush.msra.mxu0 0.0
    %195 = vmatpush.msra.mxu0 0.0
    %196 = vmatpush.msra.mxu0 0.0
    %197 = vmatpush.msra.mxu0 0.0
    %198 = vmatpush.msra.mxu0 %v181
    %199 = vmatmul.f32.gmra.mxu0 %v169
    %v200 = vpop.f32.mrf.mxu0
    %v201 = vadd.f32 0.0, %v200
    %202 = vmatmul.f32.gmra.mxu0 %v172
    %v203 = vpop.f32.mrf.mxu0
    %v204 = vadd.f32 0.0, %v203
    %205 = vmatmul.f32.gmra.mxu0 %v175
    %v206 = vpop.f32.mrf.mxu0
    %v207 = vadd.f32 0.0, %v206
    %208 = vmatmul.f32.gmra.mxu0 %v178
    %v209 = vpop.f32.mrf.mxu0
    %v210 = vadd.f32 0.0, %v209
    %211 = vdwg.mxu0
    %vm212 = vcmask 80896
    %v214 = vsel %vm212, %v156, 0
    %v217 = vsel %vm212, %v157, 0
    %v220 = vsel %vm212, %v158, 0
    %v223 = vsel %vm212, %v159, 0
    %v226 = vsel %vm124, %v161, 0
    %228 = vmatpush.msra.mxu0 0.0
    %229 = vmatpush.msra.mxu0 0.0
    %230 = vmatpush.msra.mxu0 0.0
    %231 = vmatpush.msra.mxu0 0.0
    %232 = vmatpush.msra.mxu0 0.0
    %233 = vmatpush.msra.mxu0 0.0
    %234 = vmatpush.msra.mxu0 0.0
    %235 = vmatpush.msra.mxu0 0.0
    %236 = vmatpush.msra.mxu0 0.0
    %237 = vmatpush.msra.mxu0 0.0
    %238 = vmatpush.msra.mxu0 0.0
    %239 = vmatpush.msra.mxu0 0.0
    %240 = vmatpush.msra.mxu0 0.0
    %241 = vmatpush.msra.mxu0 0.0
    %242 = vmatpush.msra.mxu0 %v226
    %243 = vmatpush.msra.mxu0 %v160
    %244 = vmatmul.f32.gmra.mxu0 %v214
    %v245 = vpop.f32.mrf.mxu0
    %v246 = vadd.f32 %v201, %v245
    %247 = vmatmul.f32.gmra.mxu0 %v217
    %v248 = vpop.f32.mrf.mxu0
    %v249 = vadd.f32 %v204, %v248
    %250 = vmatmul.f32.gmra.mxu0 %v220
    %v251 = vpop.f32.mrf.mxu0
    %v252 = vadd.f32 %v207, %v251
    %253 = vmatmul.f32.gmra.mxu0 %v223
    %v254 = vpop.f32.mrf.mxu0
    %v255 = vadd.f32 %v210, %v254
    %256 = vdwg.mxu0
    %v257 = vld [vmem:[%s4] sm:$0xff]
    %v258 = vld [vmem:[%s4 + $0x8] sm:$0xff]
    %v259 = vld [vmem:[%s4 + $0x10] sm:$0xff]
    %v260 = vld [vmem:[%s4 + $0x18] sm:$0xff]
    %262 = vset.pattern.permute.xlu0 0
    %263 = vperm.xlu0 %262, %v257
    %v264 = vpop.permute.xlu0 %263
    %267 = vset.pattern.permute.xlu0 0
    %268 = vperm.xlu0 %267, %v258
    %v269 = vpop.permute.xlu0 %268
    %272 = vset.pattern.permute.xlu0 0
    %273 = vperm.xlu0 %272, %v259
    %v274 = vpop.permute.xlu0 %273
    %277 = vset.pattern.permute.xlu0 0
    %278 = vperm.xlu0 %277, %v260
    %v279 = vpop.permute.xlu0 %278
    %v281 = vadd.f32 %v246, %v264
    %v282 = vadd.f32 %v249, %v269
    %v283 = vadd.f32 %v252, %v274
    %v284 = vadd.f32 %v255, %v279
    %v285 = vmax.f32 %v281, 0.0
    %v286 = vmax.f32 %v282, 0.0
    %v287 = vmax.f32 %v283, 0.0
    %v288 = vmax.f32 %v284, 0.0
    %v289 = vld [vmem:[%s5] sm:$0xff]
    %v290 = vld [vmem:[%s5 + $0x8] sm:$0xff]
    %v291 = vld [vmem:[%s5 + $0x10] sm:$0xff]
    %v292 = vld [vmem:[%s5 + $0x18] sm:$0xff]
    %v293 = vld [vmem:[%s6] sm:$0xff]
    %v294 = vld [vmem:[%s6 + $0x8] sm:$0xff]
    %v295 = vld [vmem:[%s6 + $0x10] sm:$0xff]
    %v296 = vld [vmem:[%s6 + $0x18] sm:$0xff]
    %298 = vset.pattern.permute.xlu0 0
    %299 = vperm.xlu0 %298, %v293
    %v300 = vpop.permute.xlu0 %299
    %303 = vset.pattern.permute.xlu0 0
    %304 = vperm.xlu0 %303, %v294
    %v305 = vpop.permute.xlu0 %304
    %308 = vset.pattern.permute.xlu0 0
    %309 = vperm.xlu0 %308, %v295
    %v310 = vpop.permute.xlu0 %309
    %313 = vset.pattern.permute.xlu0 0
    %314 = vperm.xlu0 %313, %v296
    %v315 = vpop.permute.xlu0 %314
    %vm317 = vcmask 261120
    %v319 = vsel %vm317, %v289, 0
    %v322 = vsel %vm317, %v290, 0
    %v325 = vsel %vm317, %v291, 0
    %v328 = vsel %vm317, %v292, 0
    %330 = vmatpush.msra.mxu0 0.0
    %331 = vmatpush.msra.mxu0 0.0
    %332 = vmatpush.msra.mxu0 0.0
    %333 = vmatpush.msra.mxu0 0.0
    %334 = vmatpush.msra.mxu0 0.0
    %335 = vmatpush.msra.mxu0 0.0
    %336 = vmatpush.msra.mxu0 0.0
    %337 = vmatpush.msra.mxu0 0.0
    %338 = vmatpush.msra.mxu0 0.0
    %339 = vmatpush.msra.mxu0 0.0
    %340 = vmatpush.msra.mxu0 0.0
    %341 = vmatpush.msra.mxu0 0.0
    %342 = vmatpush.msra.mxu0 %v288
    %343 = vmatpush.msra.mxu0 %v287
    %344 = vmatpush.msra.mxu0 %v286
    %345 = vmatpush.msra.mxu0 %v285
    %346 = vmatmul.f32.gmra.mxu0 %v319
    %v347 = vpop.f32.mrf.mxu0
    %v348 = vadd.f32 %v300, %v347
    %349 = vmatmul.f32.gmra.mxu0 %v322
    %v350 = vpop.f32.mrf.mxu0
    %v351 = vadd.f32 %v305, %v350
    %352 = vmatmul.f32.gmra.mxu0 %v325
    %v353 = vpop.f32.mrf.mxu0
    %v354 = vadd.f32 %v310, %v353
    %355 = vmatmul.f32.gmra.mxu0 %v328
    %v356 = vpop.f32.mrf.mxu0
    %v357 = vadd.f32 %v315, %v356
    %358 = vdwg.mxu0
    %v359 = vmax.f32 %v348, 0.0
    %v360 = vmax.f32 %v351, 0.0
    %v361 = vmax.f32 %v354, 0.0
    %v362 = vmax.f32 %v357, 0.0
    %v363 = vld [vmem:[%s7] sm:$0xff]
    %v364 = vld [vmem:[%s7 + $0x8] sm:$0xff]
    %v365 = vld [vmem:[%s7 + $0x10] sm:$0xff]
    %v366 = vld [vmem:[%s7 + $0x18] sm:$0xff]
    %368 = vset.pattern.permute.xlu0 0
    %369 = vperm.xlu0 %368, %v363
    %v370 = vpop.permute.xlu0 %369
    %373 = vset.pattern.permute.xlu0 0
    %374 = vperm.xlu0 %373, %v364
    %v375 = vpop.permute.xlu0 %374
    %378 = vset.pattern.permute.xlu0 0
    %379 = vperm.xlu0 %378, %v365
    %v380 = vpop.permute.xlu0 %379
    %383 = vset.pattern.permute.xlu0 0
    %384 = vperm.xlu0 %383, %v366
    %v385 = vpop.permute.xlu0 %384
    %v387 = vmul.f32 %v359, %v370
    %v388 = vmul.f32 %v360, %v375
    %v389 = vmul.f32 %v361, %v380
    %v390 = vmul.f32 %v362, %v385
    %v391 = vadd.f32 %v387, %v388
    %v392 = vadd.f32 %v391, %v389
    %v393 = vadd.f32 %v392, %v390
    %v394 = vrot.slane %v393, 4
    %v395 = vadd.f32 %v393, %v394
    %v396 = vrot.slane %v395, 2
    %v397 = vadd.f32 %v395, %v396
    %v398 = vrot.slane %v397, 1
    %v399 = vadd.f32 %v397, %v398
    %v400 = vld [vmem:[#allocation2] sm:$0x1]
    %402 = vset.pattern.permute.xlu0 0
    %403 = vperm.xlu0 %402, %v400
    %v404 = vpop.permute.xlu0 %403
    %v406 = vperm.slane %v404, 0
    %v407 = vadd.f32 %v406, %v155
    %v408 = vadd.f32 %v399, %v407
    %409 = vst [vmem:[#allocation3] sm:$0x1] %v408
    // Predicated region
    $region38: #{tpu_custom_call.1} parent=1 // pred_check
      _
    $region39: #{tpu_custom_call.1} parent=1 // pred_check_branch
      %411 = sbr.rel (0) target = $region41
    $region40: #{tpu_custom_call.1} parent=1 // pred_region
      %413 = vsyncadd [#allocation4], 0
      %s415 = sshll.u32 [#allocation3], 4
      %s416 = int_to_ptr.vmem [resolvable:$true] %s415
      %s417 = sshll.u32 %s9, 4
      %s418 = int_to_ptr.hbm [resolvable:$true] %s417
      %420 = dma.vmem_to_hbm [thread:$0]  %s416, 16, %s418, [#allocation4]
    $region41: #{tpu_custom_call.1} parent=1 // pred_fallthru
      _
    // Predicated region
    $region42: #{tpu_custom_call.1} parent=1 // pred_check
      _
    $region43: #{tpu_custom_call.1} parent=1 // pred_check_branch
      %422 = sbr.rel (0) target = $region45
    $region44: #{tpu_custom_call.1} parent=1 // pred_region
      %424 = dma.done [#allocation4], 16
    $region45: #{tpu_custom_call.1} parent=1 // pred_fallthru
      _
    %425 = vsyncpa [#allocation4], 1

</llo_original>
